<compile_context>
chip_gen: v7x
topology: tpu7x:2x2x1
jax: 0.10.0
libtpu: 0.0.40
codegen_flags: <defaults>
</compile_context>

<pallas_src>
import jax
import jax.numpy as jnp
from jax import lax
from jax.experimental import pallas as pl
from jax.experimental.pallas import tpu as pltpu


def _make_kernel():
    def kernel(col_ref, wf_ref, gb_ref, out_ref):
        # col_ref: (1, 9*C_in, HWT) bf16 — im2col slab for this (batch, hw-tile)
        # wf_ref : (C_out, 9*C_in)  bf16 — fused conv weights (VMEM-resident)
        # gb_ref : (1, C_out, 2)    f32  — per-batch FiLM [gamma | beta]
        # out_ref: (1, C_out, HWT)  f32  — lane-dense NCHW output tile
        acc = jnp.dot(wf_ref[...], col_ref[0],
                      preferred_element_type=jnp.float32)        # (C_out, HWT) f32
        gamma = gb_ref[0, :, 0:1]                                 # (C_out, 1)
        beta = gb_ref[0, :, 1:2]                                  # (C_out, 1)
        # FiLM + tanh epilogue stays f32; single full-tile store.
        out_ref[0] = jnp.tanh(acc * gamma + beta).astype(out_ref.dtype)

    return kernel


def _pick_hw_tile(HW, cap=2048):
    """Largest multiple-of-128 divisor of HW up to `cap` (vreg-pressure cap);
    falls back to the full extent if HW is not 128-aligned."""
    if HW % 128 != 0:
        return HW
    t = min((cap // 128) * 128, HW)
    while HW % t != 0:
        t -= 128
    return max(t, 128)


def generator_forward(images_nchw, domains, contents, params):
    """images_nchw: (B, C, H, W) f32; domains: (B, ND); contents: (B, NC)."""
    wconv, wg, bg, wb, bb = params
    B, C, H, W = images_nchw.shape
    HW = H * W

    # ---- wrapper-side layout prep (XLA copy passes, hoisted out of kernel) --
    # im2col: (B, 9*C_in, H*W), tap-major then channel; bf16 matmul operand.
    xpad = jnp.pad(images_nchw.astype(jnp.float32),
                   ((0, 0), (0, 0), (1, 1), (1, 1)))
    cols = jnp.stack(
        [xpad[:, :, ky:ky + H, kx:kx + W]
         for ky in range(3) for kx in range(3)],
        axis=1)                                                   # (B, 9, C, H, W)
    cols = cols.reshape(B, 9 * C, HW).astype(jnp.bfloat16)

    # Fused conv weights: HWIO -> (C_out, 9*C_in), column order (ky, kx, ci).
    wfused = jnp.transpose(wconv.astype(jnp.float32), (3, 0, 1, 2))
    wfused = wfused.reshape(C, 9 * C).astype(jnp.bfloat16)

    # FiLM parameters hoisted out of the kernel (tiny matmul, done once); f32.
    cond = jnp.concatenate([domains.astype(jnp.float32),
                            contents.astype(jnp.float32)], axis=-1)
    gamma = cond @ wg.T.astype(jnp.float32) + bg.astype(jnp.float32)  # (B, C)
    beta = cond @ wb.T.astype(jnp.float32) + bb.astype(jnp.float32)   # (B, C)
    gb = jnp.stack([gamma, beta], axis=-1)                            # (B, C, 2)

    hwt = _pick_hw_tile(HW)
    n_hw = HW // hwt

    out = pl.pallas_call(
        _make_kernel(),
        grid=(B, n_hw),
        in_specs=[
            pl.BlockSpec((1, 9 * C, hwt), lambda b, t: (b, 0, t)),  # im2col slab
            pl.BlockSpec((C, 9 * C), lambda b, t: (0, 0)),          # fused conv W
            pl.BlockSpec((1, C, 2), lambda b, t: (b, 0, 0)),        # FiLM [gamma|beta]
        ],
        out_specs=pl.BlockSpec((1, C, hwt), lambda b, t: (b, 0, t)),
        out_shape=jax.ShapeDtypeStruct((B, C, HW), jnp.float32),
        compiler_params=pltpu.CompilerParams(
            dimension_semantics=("parallel", "parallel")),
    )(cols, wfused, gb)

    # Already channel-major: (B, C, H*W) -> (B, C, H, W) is a free reshape.
    return out.reshape(B, C, H, W)


def _reference_forward(images_nchw, domains, contents, params):
    """Pure-JAX f32 reference for the same math (sanity check)."""
    wconv, wg, bg, wb, bb = params
    x = jnp.transpose(images_nchw, (0, 2, 3, 1))  # NHWC
    h = lax.conv_general_dilated(
        x, wconv, window_strides=(1, 1), padding="SAME",
        dimension_numbers=("NHWC", "HWIO", "NHWC"))
    cond = jnp.concatenate([domains, contents], axis=-1)          # (B, ND+NC)
    gamma = cond @ wg.T + bg                                      # (B, C)
    beta = cond @ wb.T + bb                                       # (B, C)
    out = jnp.tanh(gamma[:, None, None, :] * h + beta[:, None, None, :])
    return jnp.transpose(out, (0, 3, 1, 2))


if __name__ == "__main__":
    B, C, H, W = 2, 4, 16, 16
    ND, NC = 3, 5

    key = jax.random.PRNGKey(0)
    k_img, k_dom, k_con, k_wc, k_wg, k_bg, k_wb, k_bb = jax.random.split(key, 8)

    images = jax.random.normal(k_img, (B, C, H, W), dtype=jnp.float32)
    domains = jax.random.normal(k_dom, (B, ND), dtype=jnp.float32)
    contents = jax.random.normal(k_con, (B, NC), dtype=jnp.float32)

    # Deterministic parameter init (synthetic, not a checkpoint load).
    wconv = 0.1 * jax.random.normal(k_wc, (3, 3, C, C), dtype=jnp.float32)   # HWIO
    wg = 0.1 * jax.random.normal(k_wg, (C, ND + NC), dtype=jnp.float32)
    bg = 1.0 + 0.1 * jax.random.normal(k_bg, (C,), dtype=jnp.float32)
    wb = 0.1 * jax.random.normal(k_wb, (C, ND + NC), dtype=jnp.float32)
    bb = 0.1 * jax.random.normal(k_bb, (C,), dtype=jnp.float32)
    params = (wconv, wg, bg, wb, bb)

    out = generator_forward(images, domains, contents, params)
    out = jax.block_until_ready(out)

    ref = _reference_forward(images, domains, contents, params)
    assert out.shape == (B, C, H, W), out.shape
    assert jnp.all(jnp.isfinite(out))
    # bf16 matmul operands (f32 accumulation) -> slightly looser tolerance.
    assert jnp.allclose(out, ref, atol=3e-2, rtol=3e-2), \
        float(jnp.max(jnp.abs(out - ref)))

    print("KERNEL_OK")
</pallas_src>

<mosaic_0001>
module attributes {stable_mosaic.version = 11 : i64} {
  func.func @kernel(%arg0: i32, %arg1: i32, %arg2: memref<1x36x256xbf16, #tpu.memory_space<vmem>>, %arg3: memref<4x36xbf16, #tpu.memory_space<vmem>>, %arg4: memref<1x4x2xf32, #tpu.memory_space<vmem>>, %arg5: memref<1x4x256xf32, #tpu.memory_space<vmem>>) attributes {dimension_semantics = [#tpu.dimension_semantics<parallel>, #tpu.dimension_semantics<parallel>], iteration_bounds = array<i64: 2, 1>, scalar_prefetch = 0 : i64, scratch_operands = 0 : i64, tpu.core_type = #tpu.core_type<tc>, window_params = [{transform_indices = @transform_0, window_bounds = array<i64: 1, 36, 256>}, {pipeline_mode = #tpu.pipeline_mode<synchronous>, transform_indices = @transform_1, window_bounds = array<i64: 4, 36>}, {transform_indices = @transform_2, window_bounds = array<i64: 1, 4, 2>}, {transform_indices = @transform_3, window_bounds = array<i64: 1, 4, 256>}]} {
    %c0 = arith.constant 0 : index
    %c0_0 = arith.constant 0 : index
    %0 = vector.load %arg3[%c0, %c0_0] : memref<4x36xbf16, #tpu.memory_space<vmem>>, vector<4x36xbf16>
    %c0_1 = arith.constant 0 : index
    %c0_2 = arith.constant 0 : index
    %c0_3 = arith.constant 0 : index
    %1 = vector.load %arg2[%c0_1, %c0_2, %c0_3] : memref<1x36x256xbf16, #tpu.memory_space<vmem>>, vector<1x36x256xbf16>
    %2 = vector.shape_cast %1 : vector<1x36x256xbf16> to vector<36x256xbf16>
    %cst = arith.constant dense<0.000000e+00> : vector<4x256xf32>
    %3 = tpu.matmul %0, %2, %cst {dimension_numbers = #tpu.dot_dimension_numbers<[1], [0], [0], [1], [0, 0, 1, 1], [], []>} : vector<4x36xbf16>, vector<36x256xbf16>, vector<4x256xf32> -> vector<4x256xf32>
    %c0_4 = arith.constant 0 : index
    %c0_5 = arith.constant 0 : index
    %c0_6 = arith.constant 0 : index
    %4 = vector.load %arg4[%c0_4, %c0_5, %c0_6] : memref<1x4x2xf32, #tpu.memory_space<vmem>>, vector<1x4x1xf32>
    %5 = vector.shape_cast %4 : vector<1x4x1xf32> to vector<4x1xf32>
    %c0_7 = arith.constant 0 : index
    %c0_8 = arith.constant 0 : index
    %c1 = arith.constant 1 : index
    %6 = vector.load %arg4[%c0_7, %c0_8, %c1] : memref<1x4x2xf32, #tpu.memory_space<vmem>>, vector<1x4x1xf32>
    %7 = vector.shape_cast %6 : vector<1x4x1xf32> to vector<4x1xf32>
    %8 = vector.broadcast %5 : vector<4x1xf32> to vector<4x256xf32>
    %9 = arith.mulf %3, %8 : vector<4x256xf32>
    %10 = vector.broadcast %7 : vector<4x1xf32> to vector<4x256xf32>
    %11 = arith.addf %9, %10 : vector<4x256xf32>
    %12 = math.tanh %11 : vector<4x256xf32>
    %c0_9 = arith.constant 0 : index
    %c0_10 = arith.constant 0 : index
    %c0_11 = arith.constant 0 : index
    %13 = vector.load %arg5[%c0_9, %c0_10, %c0_11] : memref<1x4x256xf32, #tpu.memory_space<vmem>>, vector<1x4x256xf32>
    %14 = vector.shape_cast %13 : vector<1x4x256xf32> to vector<4x256xf32>
    %15 = vector.shape_cast %12 : vector<4x256xf32> to vector<1x4x256xf32>
    tpu.vector_store %arg5[%c0_9, %c0_10, %c0_11], %15 {strides = array<i32>} : memref<1x4x256xf32, #tpu.memory_space<vmem>>, vector<1x4x256xf32>,
    return
  }
  func.func @transform_0(%arg0: i32, %arg1: i32) -> (i32, i32, i32) {
    %c0_i32 = arith.constant 0 : i32
    %c0_i32_0 = arith.constant 0 : i32
    return %arg0, %c0_i32, %arg1 : i32, i32, i32
  }
  func.func @transform_1(%arg0: i32, %arg1: i32) -> (i32, i32) {
    %c0_i32 = arith.constant 0 : i32
    %c0_i32_0 = arith.constant 0 : i32
    %c0_i32_1 = arith.constant 0 : i32
    return %c0_i32, %c0_i32_0 : i32, i32
  }
  func.func @transform_2(%arg0: i32, %arg1: i32) -> (i32, i32, i32) {
    %c0_i32 = arith.constant 0 : i32
    %c0_i32_0 = arith.constant 0 : i32
    %c0_i32_1 = arith.constant 0 : i32
    return %arg0, %c0_i32, %c0_i32_0 : i32, i32, i32
  }
  func.func @transform_3(%arg0: i32, %arg1: i32) -> (i32, i32, i32) {
    %c0_i32 = arith.constant 0 : i32
    %c0_i32_0 = arith.constant 0 : i32
    return %arg0, %c0_i32, %arg1 : i32, i32, i32
  }
}

</mosaic_0001>

<llo_original>
// kernel: tpu_custom_call.1
$region0: #{tpu_custom_call.1}
  #allocation0 [shape = 'u32[]', space=smem, size = 0x4, offset = 0x4, fixed_abs, tag = 'smem constant byte address 0x4 - core index']
  #allocation1 [shape = 'u32[144,128]{1,0:T(1,128)}', space=vmem, size = 0x12000, scoped, tag = 'internal scratch']
  %s0 = inlined_call_operand.vmem [shape: bf16[2,36,256], index: 0, kind: input, shape index: {}]
  %s1 = inlined_call_operand.vmem [shape: bf16[4,36], index: 1, kind: input, shape index: {}]
  %s2 = inlined_call_operand.vmem [shape: f32[2,4,2], index: 2, kind: input, shape index: {}]
  %s3 = inlined_call_operand.hbm [shape: f32[2,4,256], index: 3, kind: output, shape index: {}]
  %s4 = sld [smem:[#allocation0]]
  $region45: #{tpu_custom_call.1} parent=0
    _
  %s6 = ssub.s32 1, %s4
  %s7 = scalar_select 0, %s6, %s4
  $region1: #{tpu_custom_call.1} parent=0
    #allocation2 [shape = 'u8[8192]{0}', space=vmem, size = 0x2000, scoped, tag = 'output window, operand 0']
    #allocation3 [shape = 's32[2]{0}', space=sflag, size = 0x8, scoped, tag = 'scoped memory for tpu_custom_call.1']
    %8 = vsyncpa [#allocation3], 0
    %s9 = scalar_lea.sflag [#allocation3], 1
    %10 = vsyncpa %s9, 0
    loop: start=0, step=1, limit=4
    $region2: #{tpu_custom_call.1} parent=1 // loop_pre_header
      _
    $region3: #{tpu_custom_call.1} parent=1 // loop_header
      %s12 = sphi 0, %s16
      %p13 = scmp.ge.s32.totalorder %s12, 4
      %s19 = sphi 0, %s31
      %s20 = sphi 0, %s27
      %s21 = sphi 0, %s19
      %s22 = sphi 0, %s20
      %s23 = sphi 0, %s21
      %s24 = sphi 0, %s22
      %s36 = sphi 0, %s38
      %s39 = sphi 0, %s36
      %s40 = sphi 0, %s39
      %s56 = sphi 0, %s40
      %s60 = sphi 0, %s60
      %s62 = sphi 0, %s60
      %s63 = sphi 0, %s62
      %s77 = sphi 0, %s63
      %s83 = sphi 0, %s85
      %s86 = sphi 0, %s83
      %s87 = sphi 0, %s86
      %s103 = sphi 0, %s87
      %s111 = sphi 0, %s113
      %s114 = sphi 0, %s111
      %s115 = sphi 0, %s114
      %s131 = sphi 0, %s115
    $region4: #{tpu_custom_call.1} parent=1 // loop_header_branch
      %15 = sbr.rel (%p13) target = $region8
    $region5: #{tpu_custom_call.1} parent=1 // loop_body
      %s17 = ssub.s32 %s12, 1
      %s18 = ssub.s32 %s12, 2
      %s25 = sadd.s32 1, %s20
      %p26 = scmp.ge.s32.totalorder %s25, 1
      %s27 = scalar_select %p26, 0, %s25
      %s28 = sadd.s32 1, %s19
      %s29 = scalar_select %p26, %s28, %s19
      %p30 = scmp.ge.s32.totalorder %s29, 2
      %s31 = scalar_select %p30, 0, %s29
      %s32 = ssub.s32 %s19, %s31
      %s33 = ssub.s32 %s20, %s27
      %s34 = sor.u32 %s32, %s33
      %p35 = scmp.eq.s32.totalorder %s34, 0
      %s37 = sadd.s32 %s36, 1
      %s38 = scalar_select %p35, %s36, %s37
      %p41 = pneg %p35
      %p42 = scmp.eq.s32.totalorder %s12, 1
      %p43 = por %p41, %p42
      %p44 = scmp.ne.s32.totalorder %s36, %s39
      %p45 = scmp.eq.s32.totalorder %s12, 0
      %p46 = por %p44, %p45
      %p47 = scmp.ne.s32.totalorder %s36, %s39
      %p48 = scmp.eq.s32.totalorder %s17, 1
      %p49 = por %p47, %p48
      %p50 = scmp.ne.s32.totalorder %s39, %s40
      %p51 = scmp.eq.s32.totalorder %s17, 0
      %p52 = por %p50, %p51
      %p53 = scmp.ne.s32.totalorder %s39, %s40
      %p54 = scmp.eq.s32.totalorder %s18, 1
      %p55 = por %p53, %p54
      %p57 = scmp.ne.s32.totalorder %s40, %s56
      %p58 = scmp.eq.s32.totalorder %s18, 0
      %p59 = por %p57, %p58
      %s61 = sadd.s32 %s60, 1
      %p64 = scmp.eq.s32.totalorder %s12, 1
      %p65 = scmp.ne.s32.totalorder %s60, %s62
      %p66 = scmp.eq.s32.totalorder %s12, 0
      %p67 = por %p65, %p66
      %p68 = scmp.ne.s32.totalorder %s60, %s62
      %p69 = scmp.eq.s32.totalorder %s17, 1
      %p70 = por %p68, %p69
      %p71 = scmp.ne.s32.totalorder %s62, %s63
      %p72 = scmp.eq.s32.totalorder %s17, 0
      %p73 = por %p71, %p72
      %p74 = scmp.ne.s32.totalorder %s62, %s63
      %p75 = scmp.eq.s32.totalorder %s18, 1
      %p76 = por %p74, %p75
      %p78 = scmp.ne.s32.totalorder %s63, %s77
      %p79 = scmp.eq.s32.totalorder %s18, 0
      %p80 = por %p78, %p79
      %s81 = ssub.s32 %s19, %s31
      %p82 = scmp.eq.s32.totalorder %s81, 0
      %s84 = sadd.s32 %s83, 1
      %s85 = scalar_select %p82, %s83, %s84
      %p88 = pneg %p82
      %p89 = scmp.eq.s32.totalorder %s12, 1
      %p90 = por %p88, %p89
      %p91 = scmp.ne.s32.totalorder %s83, %s86
      %p92 = scmp.eq.s32.totalorder %s12, 0
      %p93 = por %p91, %p92
      %p94 = scmp.ne.s32.totalorder %s83, %s86
      %p95 = scmp.eq.s32.totalorder %s17, 1
      %p96 = por %p94, %p95
      %p97 = scmp.ne.s32.totalorder %s86, %s87
      %p98 = scmp.eq.s32.totalorder %s17, 0
      %p99 = por %p97, %p98
      %p100 = scmp.ne.s32.totalorder %s86, %s87
      %p101 = scmp.eq.s32.totalorder %s18, 1
      %p102 = por %p100, %p101
      %p104 = scmp.ne.s32.totalorder %s87, %s103
      %p105 = scmp.eq.s32.totalorder %s18, 0
      %p106 = por %p104, %p105
      %s107 = ssub.s32 %s19, %s31
      %s108 = ssub.s32 %s20, %s27
      %s109 = sor.u32 %s107, %s108
      %p110 = scmp.eq.s32.totalorder %s109, 0
      %s112 = sadd.s32 %s111, 1
      %s113 = scalar_select %p110, %s111, %s112
      %p116 = pneg %p110
      %p117 = scmp.eq.s32.totalorder %s12, 1
      %p118 = por %p116, %p117
      %p119 = scmp.ne.s32.totalorder %s111, %s114
      %p120 = scmp.eq.s32.totalorder %s12, 0
      %p121 = por %p119, %p120
      %p122 = scmp.ne.s32.totalorder %s111, %s114
      %p123 = scmp.eq.s32.totalorder %s17, 1
      %p124 = por %p122, %p123
      %p125 = scmp.ne.s32.totalorder %s114, %s115
      %p126 = scmp.eq.s32.totalorder %s17, 0
      %p127 = por %p125, %p126
      %p128 = scmp.ne.s32.totalorder %s114, %s115
      %p129 = scmp.eq.s32.totalorder %s18, 1
      %p130 = por %p128, %p129
      %p132 = scmp.ne.s32.totalorder %s115, %s131
      %p133 = scmp.eq.s32.totalorder %s18, 0
      %p134 = por %p132, %p133
      %p135 = scmp.le.s32.totalorder 1, %s12
      %p136 = scmp.lt.s32.totalorder %s12, 3
      %p137 = pnand %p135, %p136
      %p138 = pneg %p137
      // Predicated region
      $region9: #{tpu_custom_call.1} parent=5 // pred_check
        _
      $region10: #{tpu_custom_call.1} parent=5 // pred_check_branch
        %140 = sbr.rel (%p137) target = $region12
      $region11: #{tpu_custom_call.1} parent=5 // pred_region
        %s141 = ssub.s32 %s12, 1
        // Predicated region
        $region13: #{tpu_custom_call.1} parent=11 // pred_check
          %p142 = pneg %p73
        $region14: #{tpu_custom_call.1} parent=11 // pred_check_branch
          %144 = sbr.rel (%p142) target = $region16
        $region15: #{tpu_custom_call.1} parent=11 // pred_region
          _
        $region16: #{tpu_custom_call.1} parent=11 // pred_fallthru
          _
      $region12: #{tpu_custom_call.1} parent=5 // pred_fallthru
        _
      %p145 = scmp.lt.s32.totalorder %s12, 2
      // Predicated region
      $region17: #{tpu_custom_call.1} parent=5 // pred_check
        %p146 = pneg %p145
      $region18: #{tpu_custom_call.1} parent=5 // pred_check_branch
        %148 = sbr.rel (%p146) target = $region20
      $region19: #{tpu_custom_call.1} parent=5 // pred_region
        // Predicated region
        $region21: #{tpu_custom_call.1} parent=19 // pred_check
          %p149 = pneg %p46
        $region22: #{tpu_custom_call.1} parent=19 // pred_check_branch
          %151 = sbr.rel (%p149) target = $region24
        $region23: #{tpu_custom_call.1} parent=19 // pred_region
          %s152 = smul.u32 2, %s20
          %p153 = scmp.lt.s32.totalorder %s19, 1
          %s154 = scalar_select %p153, %s19, 1
          %p155 = scmp.lt.s32.totalorder %s152, 1
          %s156 = scalar_select %p155, %s152, 1
          %s157 = smul.addr %s154, 10
          %s158 = sadd.s32 %s156, %s157
          %s159 = smul.addr %s158, 4
          %s160 = scalar_lea.vmem %s0, %s159
          %s161 = smul.u32 2, %s20
        $region24: #{tpu_custom_call.1} parent=19 // pred_fallthru
          _
        // Predicated region
        $region25: #{tpu_custom_call.1} parent=19 // pred_check
          %p162 = pneg %p93
        $region26: #{tpu_custom_call.1} parent=19 // pred_check_branch
          %164 = sbr.rel (%p162) target = $region28
        $region27: #{tpu_custom_call.1} parent=19 // pred_region
          %p165 = scmp.lt.s32.totalorder %s19, 1
          %s166 = scalar_select %p165, %s19, 1
          %s167 = smul.addr %s166, 4
          %s168 = scalar_lea.vmem %s2, %s167
        $region28: #{tpu_custom_call.1} parent=19 // pred_fallthru
          _
      $region20: #{tpu_custom_call.1} parent=5 // pred_fallthru
        _
      %p169 = scmp.le.s32.totalorder 1, %s12
      %p170 = scmp.lt.s32.totalorder %s12, 3
      %p171 = pnand %p169, %p170
      %p172 = pneg %p171
      // Predicated region
      $region29: #{tpu_custom_call.1} parent=5 // pred_check
        _
      $region30: #{tpu_custom_call.1} parent=5 // pred_check_branch
        %174 = sbr.rel (%p171) target = $region32
      $region31: #{tpu_custom_call.1} parent=5 // pred_region
        %s175 = ssub.s32 %s12, 1
        %s176 = smul.u32 2, %s22
        %p177 = scmp.lt.s32.totalorder %s21, 1
        %s178 = scalar_select %p177, %s21, 1
        %p179 = scmp.lt.s32.totalorder %s176, 1
        %s180 = scalar_select %p179, %s176, 1
        %s181 = smul.addr %s178, 10
        %s182 = sadd.s32 %s180, %s181
        %s183 = smul.addr %s182, 4
        %s184 = scalar_lea.vmem %s0, %s183
        %p185 = pneg %p52
        %p186 = pneg %p49
        %p187 = pneg %p73
        %p188 = pneg %p70
        %p189 = scmp.lt.s32.totalorder %s21, 1
        %s190 = scalar_select %p189, %s21, 1
        %s191 = smul.addr %s190, 4
        %s192 = scalar_lea.vmem %s2, %s191
        %p193 = pneg %p99
        %p194 = pneg %p96
        %p195 = pneg %p127
        %p196 = pneg %p124
        %s197 = sand.u32 %s114, 1
        %s198 = scalar_lea.sflag [#allocation3], %s197
        %s199 = sand.u32 %s114, 1
        %s200 = smul.addr %s199, 8
        %s201 = scalar_lea.vmem [#allocation2], %s200
        %s202 = smul.u32 2, %s22
        %p203 = scmp.lt.s32.totalorder %s21, 1
        %s204 = scalar_select %p203, %s21, 1
        %p205 = scmp.lt.s32.totalorder %s202, 1
        %s206 = scalar_select %p205, %s202, 1
        %s207 = smul.addr %s204, 10
        %s208 = sadd.s32 %s206, %s207
        %s209 = smul.addr %s208, 4
        %s210 = scalar_lea.vmem %s0, %s209
        %s211 = smul.u32 2, %s22
        %p212 = scmp.lt.s32.totalorder %s21, 1
        %s213 = scalar_select %p212, %s21, 1
        %s214 = smul.addr %s213, 4
        %s215 = scalar_lea.vmem %s2, %s214
        %s216 = smul.u32 2, %s22
        %v218 = vld [vmem:[%s1] sm:$0x3]
        %v219 = vld [vmem:[%s210] sm:$0xff]
        %v220 = vld [vmem:[%s210 + $0x8] sm:$0xff]
        %v221 = vld [vmem:[%s210 + $0x10] sm:$0xff]
        %v222 = vld [vmem:[%s210 + $0x18] sm:$0xff]
        %v223 = vld [vmem:[%s210 + $0x20] sm:$0x33]
        %v229 = vunpack.c.l.b16 %v219
        %v230 = vunpack.c.h.b16 %v219
        %v231 = vunpack.c.l.b16 %v220
        %v232 = vunpack.c.h.b16 %v220
        %v233 = vunpack.c.l.b16 %v221
        %v234 = vunpack.c.h.b16 %v221
        %v235 = vunpack.c.l.b16 %v222
        %v236 = vunpack.c.h.b16 %v222
        %v237 = vunpack.c.l.b16 %v223
        %v238 = vunpack.c.h.b16 %v223
        %v239 = vpack.c.b16 %v231, %v229
        %v240 = vpack.c.b16 %v232, %v230
        %v241 = vpack.c.b16 %v235, %v233
        %v242 = vpack.c.b16 %v236, %v234
        %v243 = vpack.c.b16 %v237, %v237
        %v244 = vpack.c.b16 %v238, %v238
        %vm249 = vcmask 293888
        %v251 = vsel %vm249, %v218, 0
        %vm253 = vcmask 1041408
        %v255 = vsel %vm253, %v243, 0
        %v258 = vsel %vm253, %v244, 0
        %260 = vmatprep.subr.bf16.mxu0 %v240
        %261 = vmatpush1.bf16.msra.mxu0 %v239
        %262 = vmatprep.subr.bf16.mxu0 %v242
        %263 = vmatpush1.bf16.msra.mxu0 %v241
        %264 = vmatprep.subr.bf16.mxu0 %v258
        %265 = vmatpush1.bf16.msra.mxu0 %v255
        %266 = vmatprep.subr.bf16.mxu0 0
        %267 = vmatpush1.bf16.msra.mxu0 0
        %268 = vmatprep.subr.bf16.mxu0 0
        %269 = vmatpush1.bf16.msra.mxu0 0
        %270 = vmatprep.subr.bf16.mxu0 0
        %271 = vmatpush1.bf16.msra.mxu0 0
        %272 = vmatprep.subr.bf16.mxu0 0
        %273 = vmatpush1.bf16.msra.mxu0 0
        %274 = vmatprep.subr.bf16.mxu0 0
        %275 = vmatpush1.bf16.msra.mxu0 0
        %276 = vmatprep.subr.bf16.mxu0 0
        %277 = vmatpush1.bf16.msra.mxu0 0
        %278 = vmatprep.subr.bf16.mxu0 0
        %279 = vmatpush1.bf16.msra.mxu0 0
        %280 = vmatprep.subr.bf16.mxu0 0
        %281 = vmatpush1.bf16.msra.mxu0 0
        %282 = vmatprep.subr.bf16.mxu0 0
        %283 = vmatpush1.bf16.msra.mxu0 0
        %284 = vmatprep.subr.bf16.mxu0 0
        %285 = vmatpush1.bf16.msra.mxu0 0
        %286 = vmatprep.subr.bf16.mxu0 0
        %287 = vmatpush1.bf16.msra.mxu0 0
        %288 = vmatprep.subr.bf16.mxu0 0
        %289 = vmatpush1.bf16.msra.mxu0 0
        %290 = vmatprep.subr.bf16.mxu0 0
        %291 = vmatpush1.bf16.msra.mxu0 0
        %292 = vmatprep.mubr.bf16.mxu0 0
        %293 = vmatmul.mubr.bf16.gmra.mrb[0].mxu0 %v251
        %v294 = vpop.f32.mrb[0].mxu0
        %v295 = vadd.f32 0.0, %v294
        %v296 = vpop.f32.mrb[0].mxu0
        %v297 = vadd.f32 0.0, %v296
        %v298 = vpop.f32.mrb[0].mxu0
        %v299 = vpop.f32.mrb[0].mxu0
        %300 = vdwg.mxu0
        %v301 = vld [vmem:[%s215] sm:$0xf]
        %303 = vset.pattern.permute.xlu0 0
        %304 = vperm.xlu0 %303, %v301
        %v305 = vpop.permute.xlu0 %304
        %v307 = vmul.f32 %v295, %v305
        %v308 = vmul.f32 %v297, %v305
        %309 = vset.pattern.permute.xlu0 1
        %310 = vperm.xlu0 %309, %v301
        %v311 = vpop.permute.xlu0 %310
        %v313 = vadd.f32 %v307, %v311
        %v314 = vadd.f32 %v308, %v311
        %v315 = vtanh.pop %v313
        %v316 = vtanh.pop %v314
        %v319 = vcombine.low %v315, %v316
        %321 = vst [vmem:[%s201] sm:$0xff] %v319
        %s322 = sand.u32 %s114, 1
        %s323 = scalar_lea.sflag [#allocation3], %s322
        %s324 = sand.u32 %s114, 1
        %s325 = smul.addr %s324, 8
        %s326 = scalar_lea.vmem [#allocation2], %s325
        // Predicated region
        $region33: #{tpu_custom_call.1} parent=31 // pred_check
          %p327 = pneg %p124
        $region34: #{tpu_custom_call.1} parent=31 // pred_check_branch
          %329 = sbr.rel (%p327) target = $region36
        $region35: #{tpu_custom_call.1} parent=31 // pred_region
          %s330 = smul.u32 2, %s22
          %s332 = ssub.s32 128, 128
          %333 = vsyncadd %s323, %s332
          %s334 = smul.addr %s21, 2
          %s335 = sadd.s32 %s330, %s334
          %s336 = smul.addr %s335, 64
          %s337 = scalar_lea.hbm %s3, %s336
          %s339 = sshll.u32 %s326, 4
          %s340 = int_to_ptr.vmem [resolvable:$true] %s339
          %342 = dma.vmem_to_hbm [thread:$0]  %s340, 128, %s337, %s323
        $region36: #{tpu_custom_call.1} parent=31 // pred_fallthru
          _
      $region32: #{tpu_custom_call.1} parent=5 // pred_fallthru
        _
      %p343 = scmp.le.s32.totalorder 2, %s12
      // Predicated region
      $region37: #{tpu_custom_call.1} parent=5 // pred_check
        %p344 = pneg %p343
      $region38: #{tpu_custom_call.1} parent=5 // pred_check_branch
        %346 = sbr.rel (%p344) target = $region40
      $region39: #{tpu_custom_call.1} parent=5 // pred_region
        %s347 = ssub.s32 %s12, 2
        // Predicated region
        $region41: #{tpu_custom_call.1} parent=39 // pred_check
          %p348 = pneg %p130
        $region42: #{tpu_custom_call.1} parent=39 // pred_check_branch
          %350 = sbr.rel (%p348) target = $region44
        $region43: #{tpu_custom_call.1} parent=39 // pred_region
          %s351 = sand.u32 %s115, 1
          %s352 = scalar_lea.sflag [#allocation3], %s351
          %s353 = sand.u32 %s115, 1
          %s354 = smul.addr %s353, 8
          %s355 = scalar_lea.vmem [#allocation2], %s354
          %356 = dma.done %s352, 128
        $region44: #{tpu_custom_call.1} parent=39 // pred_fallthru
          _
      $region40: #{tpu_custom_call.1} parent=5 // pred_fallthru
        _
    $region6: #{tpu_custom_call.1} parent=1 // loop_footer
      %s16 = sadd.s32 1, %s12
    $region7: #{tpu_custom_call.1} parent=1 // loop_footer_branch
      %11 = sbr.rel target = $region3
    $region8: #{tpu_custom_call.1} parent=1 // loop_exit
      _
    %357 = vsyncpa [#allocation3], 1
    %s358 = scalar_lea.sflag [#allocation3], 1
    %359 = vsyncpa %s358, 1

</llo_original>
